<compile_context>
chip_gen: v7x
topology: tpu7x:2x2x1
jax: 0.10.0
libtpu: 0.0.40
codegen_flags: <defaults>
</compile_context>

<pallas_src>
import math

import jax
import jax.numpy as jnp
from jax.experimental import pallas as pl
from jax.experimental.pallas import tpu as pltpu


def _graphconv_kernel(x_ref, adjblk_ref, w_ref, shift_ref, o_ref):
    # x_ref:      (TB*J, Cin)    batch-on-rows activation slab (per grid step)
    # adjblk_ref: (TB*J, TB*J)   blockdiag(adj), resident across grid steps
    # w_ref:      (Cin, Cout)    W * bn_scale (folded), resident
    # shift_ref:  (1, Cout)      b*scale + beta - mean*scale (f32), resident
    # o_ref:      (TB*J, Cout)   output slab
    # Stage 1: per-batch graph aggregation, all TB batch elements in one matmul.
    z = jnp.dot(adjblk_ref[...], x_ref[...], preferred_element_type=jnp.float32)
    # Stage 2: dense feature transform, full MXU row fill (TB*J rows).
    y = jnp.dot(z.astype(w_ref.dtype), w_ref[...],
                preferred_element_type=jnp.float32)
    # Fused bias + eval-mode BatchNorm + ReLU epilogue (f32), cast on store.
    o_ref[...] = jnp.maximum(y + shift_ref[...], 0.0).astype(o_ref.dtype)


def _round_up(x, m):
    return ((x + m - 1) // m) * m


def _pick_batch_tile(B, J, itemsize, max_rows=1024):
    """Pick TB so per-step blocks are sublane aligned and TB*J <= max_rows."""
    sub = 8 if itemsize >= 4 else (16 if itemsize == 2 else 32)
    m = sub // math.gcd(J, sub)            # TB multiple keeping TB*J % sub == 0
    tb_cap = max(1, max_rows // J)
    tb_cap = max(m, (tb_cap // m) * m)
    if B <= tb_cap:
        return B, m                        # single grid step: full-dim block
    return tb_cap, m


def graph_conv_bn_relu(x, adj, w, b, bn_gamma, bn_beta, bn_mean, bn_var,
                       eps=1e-5, compute_dtype=None, max_rows=1024):
    """Vanilla GCN + BatchNorm1d(eval) + ReLU.  x: (B,J,Cin) -> (B,J,Cout)."""
    B, J, Cin = x.shape
    Cout = w.shape[1]
    out_dtype = x.dtype

    # ---- Fold bias + eval-mode BN into the weights and a single f32 shift ----
    #   (adj @ x @ W + b) * scale + (beta - mean*scale)
    #     = adj @ x @ (W*scale) + (b*scale + beta - mean*scale)
    scale = bn_gamma / jnp.sqrt(bn_var + eps)                       # (Cout,)
    shift = (b * scale + bn_beta - bn_mean * scale).reshape(1, Cout)
    shift = shift.astype(jnp.float32)

    # compute_dtype=jnp.bfloat16 recommended on v6e/v7x (halves DMA bytes,
    # native MXU path); f32 accumulation + f32 epilogue kept in-kernel.
    cdt = jnp.dtype(compute_dtype) if compute_dtype is not None else jnp.dtype(out_dtype)
    x_c = x.astype(cdt)
    adj_c = adj.astype(cdt)
    w_f = (w * scale[None, :]).astype(cdt)

    # ---- Batch tile (rows per grid step = TB*J) ----
    TB, m = _pick_batch_tile(B, J, cdt.itemsize, max_rows=max_rows)

    # v7x has 2 TensorCores per chip: ensure the "parallel" batch axis has at
    # least 2 grid steps so both cores get work.  v5e/v6e: keep one wide step.
    kind = jax.devices()[0].device_kind.lower()
    if ("v7" in kind or "7x" in kind) and B >= 2 and _round_up(B, TB) // TB < 2:
        half = _round_up((B + 1) // 2, m)
        if half < B:
            TB = half
    B_pad = _round_up(B, TB)
    rows = TB * J

    # ---- Wrapper-side slabs (free reshapes; pad only if B_pad > B) ----
    x_p = x_c if B_pad == B else jnp.pad(x_c, ((0, B_pad - B), (0, 0), (0, 0)))
    x_slab = x_p.reshape(B_pad * J, Cin)                 # batch-on-rows, free
    adj_blk = jnp.kron(jnp.eye(TB, dtype=cdt), adj_c)    # (rows, rows), static

    # ---- VMEM budget (default double-buffered tiles) + explicit scoped limit ----
    vmem_est = (2 * rows * rows * cdt.itemsize                         # adj_blk
                + 2 * rows * Cin * cdt.itemsize                        # x slab
                + 2 * rows * Cout * jnp.dtype(out_dtype).itemsize      # out slab
                + 2 * Cin * Cout * cdt.itemsize + 2 * Cout * 4)        # weights/shift
    vmem_limit = int(min(max(4 * vmem_est, 32 * 2**20), 48 * 2**20))   # v7x-safe cap

    grid_spec = pltpu.PrefetchScalarGridSpec(
        num_scalar_prefetch=0,
        grid=(B_pad // TB,),
        in_specs=[
            pl.BlockSpec((rows, Cin), lambda i: (i, 0)),    # x slab (per step)
            pl.BlockSpec((rows, rows), lambda i: (0, 0)),   # blockdiag(adj), resident
            pl.BlockSpec((Cin, Cout), lambda i: (0, 0)),    # folded weights, resident
            pl.BlockSpec((1, Cout), lambda i: (0, 0)),      # folded shift, resident
        ],
        out_specs=pl.BlockSpec((rows, Cout), lambda i: (i, 0)),
    )

    out_slab = pl.pallas_call(
        _graphconv_kernel,
        out_shape=jax.ShapeDtypeStruct((B_pad * J, Cout), out_dtype),
        grid_spec=grid_spec,
        compiler_params=pltpu.CompilerParams(
            dimension_semantics=("parallel",),
            vmem_limit_bytes=vmem_limit),
    )(x_slab, adj_blk, w_f, shift)

    # Back to the module's (B, J, Cout) layout (free reshape + slice).
    return out_slab.reshape(B_pad, J, Cout)[:B]


def _reference(x, adj, w, b, bn_gamma, bn_beta, bn_mean, bn_var, eps=1e-5):
    y = jnp.einsum("jk,bkc->bjc", adj, jnp.einsum("bji,io->bjo", x, w)) + b
    scale = bn_gamma / jnp.sqrt(bn_var + eps)
    shift = bn_beta - bn_mean * scale
    return jnp.maximum(y * scale + shift, 0.0)


if __name__ == "__main__":
    key = jax.random.PRNGKey(0)
    B, J, Cin, Cout = 2, 16, 16, 32

    k_x, k_adj, k_w, k_b, k_g, k_be, k_m, k_v = jax.random.split(key, 8)

    x = jax.random.normal(k_x, (B, J, Cin), dtype=jnp.float32)

    # Symmetric row-normalized adjacency (deterministic).
    a_raw = jax.random.uniform(k_adj, (J, J), dtype=jnp.float32)
    a_sym = 0.5 * (a_raw + a_raw.T) + jnp.eye(J, dtype=jnp.float32)
    adj = a_sym / jnp.sum(a_sym, axis=-1, keepdims=True)

    w = jax.random.normal(k_w, (Cin, Cout), dtype=jnp.float32) * 0.1
    b = jax.random.normal(k_b, (Cout,), dtype=jnp.float32) * 0.1

    bn_gamma = 1.0 + 0.1 * jax.random.normal(k_g, (Cout,), dtype=jnp.float32)
    bn_beta = 0.1 * jax.random.normal(k_be, (Cout,), dtype=jnp.float32)
    bn_mean = 0.1 * jax.random.normal(k_m, (Cout,), dtype=jnp.float32)
    bn_var = jnp.abs(1.0 + 0.1 * jax.random.normal(k_v, (Cout,), dtype=jnp.float32))

    out = graph_conv_bn_relu(x, adj, w, b, bn_gamma, bn_beta, bn_mean, bn_var)
    out = jax.block_until_ready(out)

    ref = _reference(x, adj, w, b, bn_gamma, bn_beta, bn_mean, bn_var)
    assert out.shape == (B, J, Cout)
    assert out.dtype == x.dtype
    assert jnp.allclose(out, ref, atol=1e-4, rtol=1e-4), "mismatch vs reference"

    print("KERNEL_OK")
</pallas_src>

<mosaic_0001>
module attributes {stable_mosaic.version = 11 : i64} {
  func.func @_graphconv_kernel(%arg0: i32, %arg1: memref<32x16xf32, #tpu.memory_space<vmem>>, %arg2: memref<32x32xf32, #tpu.memory_space<vmem>>, %arg3: memref<16x32xf32, #tpu.memory_space<vmem>>, %arg4: memref<1x32xf32, #tpu.memory_space<vmem>>, %arg5: memref<32x32xf32, #tpu.memory_space<vmem>>) attributes {dimension_semantics = [#tpu.dimension_semantics<parallel>], iteration_bounds = array<i64: 1>, scalar_prefetch = 0 : i64, scratch_operands = 0 : i64, tpu.core_type = #tpu.core_type<tc>, window_params = [{transform_indices = @transform_0, window_bounds = array<i64: 32, 16>}, {pipeline_mode = #tpu.pipeline_mode<synchronous>, transform_indices = @transform_1, window_bounds = array<i64: 32, 32>}, {pipeline_mode = #tpu.pipeline_mode<synchronous>, transform_indices = @transform_2, window_bounds = array<i64: 16, 32>}, {pipeline_mode = #tpu.pipeline_mode<synchronous>, transform_indices = @transform_3, window_bounds = array<i64: 1, 32>}, {transform_indices = @transform_4, window_bounds = array<i64: 32, 32>}]} {
    %c0 = arith.constant 0 : index
    %c0_0 = arith.constant 0 : index
    %0 = vector.load %arg2[%c0, %c0_0] : memref<32x32xf32, #tpu.memory_space<vmem>>, vector<32x32xf32>
    %c0_1 = arith.constant 0 : index
    %c0_2 = arith.constant 0 : index
    %1 = vector.load %arg1[%c0_1, %c0_2] : memref<32x16xf32, #tpu.memory_space<vmem>>, vector<32x16xf32>
    %cst = arith.constant dense<0.000000e+00> : vector<32x16xf32>
    %2 = tpu.matmul %0, %1, %cst {dimension_numbers = #tpu.dot_dimension_numbers<[1], [0], [0], [1], [0, 0, 1, 1], [], []>} : vector<32x32xf32>, vector<32x16xf32>, vector<32x16xf32> -> vector<32x16xf32>
    %c0_3 = arith.constant 0 : index
    %c0_4 = arith.constant 0 : index
    %3 = vector.load %arg3[%c0_3, %c0_4] : memref<16x32xf32, #tpu.memory_space<vmem>>, vector<16x32xf32>
    %cst_5 = arith.constant dense<0.000000e+00> : vector<32x32xf32>
    %4 = tpu.matmul %2, %3, %cst_5 {dimension_numbers = #tpu.dot_dimension_numbers<[1], [0], [0], [1], [0, 0, 1, 1], [], []>} : vector<32x16xf32>, vector<16x32xf32>, vector<32x32xf32> -> vector<32x32xf32>
    %c0_6 = arith.constant 0 : index
    %c0_7 = arith.constant 0 : index
    %5 = vector.load %arg4[%c0_6, %c0_7] : memref<1x32xf32, #tpu.memory_space<vmem>>, vector<1x32xf32>
    %6 = vector.broadcast %5 : vector<1x32xf32> to vector<32x32xf32>
    %7 = arith.addf %4, %6 : vector<32x32xf32>
    %cst_8 = arith.constant 0.000000e+00 : f32
    %8 = vector.broadcast %cst_8 : f32 to vector<32x32xf32>
    %9 = arith.maximumf %7, %8 : vector<32x32xf32>
    %c0_9 = arith.constant 0 : index
    %c0_10 = arith.constant 0 : index
    %10 = vector.load %arg5[%c0_9, %c0_10] : memref<32x32xf32, #tpu.memory_space<vmem>>, vector<32x32xf32>
    tpu.vector_store %arg5[%c0_9, %c0_10], %9 {strides = array<i32>} : memref<32x32xf32, #tpu.memory_space<vmem>>, vector<32x32xf32>,
    return
  }
  func.func @transform_0(%arg0: i32) -> (i32, i32) {
    %c0_i32 = arith.constant 0 : i32
    %c0_i32_0 = arith.constant 0 : i32
    return %arg0, %c0_i32 : i32, i32
  }
  func.func @transform_1(%arg0: i32) -> (i32, i32) {
    %c0_i32 = arith.constant 0 : i32
    %c0_i32_0 = arith.constant 0 : i32
    %c0_i32_1 = arith.constant 0 : i32
    return %c0_i32, %c0_i32_0 : i32, i32
  }
  func.func @transform_2(%arg0: i32) -> (i32, i32) {
    %c0_i32 = arith.constant 0 : i32
    %c0_i32_0 = arith.constant 0 : i32
    %c0_i32_1 = arith.constant 0 : i32
    return %c0_i32, %c0_i32_0 : i32, i32
  }
  func.func @transform_3(%arg0: i32) -> (i32, i32) {
    %c0_i32 = arith.constant 0 : i32
    %c0_i32_0 = arith.constant 0 : i32
    %c0_i32_1 = arith.constant 0 : i32
    return %c0_i32, %c0_i32_0 : i32, i32
  }
  func.func @transform_4(%arg0: i32) -> (i32, i32) {
    %c0_i32 = arith.constant 0 : i32
    %c0_i32_0 = arith.constant 0 : i32
    return %arg0, %c0_i32 : i32, i32
  }
}

</mosaic_0001>

<llo_original>
// kernel: tpu_custom_call.1
$region0: #{tpu_custom_call.1}
  #allocation0 [shape = 'u32[]', space=smem, size = 0x4, offset = 0x4, fixed_abs, tag = 'smem constant byte address 0x4 - core index']
  #allocation1 [shape = 'u32[144,128]{1,0:T(1,128)}', space=vmem, size = 0x12000, scoped, tag = 'internal scratch']
  %s0 = inlined_call_operand.vmem [shape: f32[32,16], index: 0, kind: input, shape index: {}]
  %s1 = inlined_call_operand.vmem [shape: f32[32,32], index: 1, kind: input, shape index: {}]
  %s2 = inlined_call_operand.vmem [shape: f32[16,32], index: 2, kind: input, shape index: {}]
  %s3 = inlined_call_operand.vmem [shape: f32[1,32], index: 3, kind: input, shape index: {}]
  %s4 = inlined_call_operand.hbm [shape: f32[32,32], index: 4, kind: output, shape index: {}]
  %s5 = sld [smem:[#allocation0]]
  $region26: #{tpu_custom_call.1} parent=0
    _
  %s7 = ssub.s32 1, %s5
  %s8 = scalar_select 0, %s7, %s5
  $region1: #{tpu_custom_call.1} parent=0
    #allocation2 [shape = 'u8[16384]{0}', space=vmem, size = 0x4000, scoped, tag = 'output window, operand 0, single buffered']
    #allocation3 [shape = 's32[1]{0}', space=sflag, size = 0x4, scoped, tag = 'scoped memory for tpu_custom_call.1']
    %9 = vsyncpa [#allocation3], 0
    // Predicated region
    $region2: #{tpu_custom_call.1} parent=1 // pred_check
      _
    $region3: #{tpu_custom_call.1} parent=1 // pred_check_branch
      %11 = sbr.rel (0) target = $region5
    $region4: #{tpu_custom_call.1} parent=1 // pred_region
      _
    $region5: #{tpu_custom_call.1} parent=1 // pred_fallthru
      _
    // Predicated region
    $region6: #{tpu_custom_call.1} parent=1 // pred_check
      _
    $region7: #{tpu_custom_call.1} parent=1 // pred_check_branch
      %13 = sbr.rel (0) target = $region9
    $region8: #{tpu_custom_call.1} parent=1 // pred_region
      _
    $region9: #{tpu_custom_call.1} parent=1 // pred_fallthru
      _
    // Predicated region
    $region10: #{tpu_custom_call.1} parent=1 // pred_check
      _
    $region11: #{tpu_custom_call.1} parent=1 // pred_check_branch
      %15 = sbr.rel (0) target = $region13
    $region12: #{tpu_custom_call.1} parent=1 // pred_region
      _
    $region13: #{tpu_custom_call.1} parent=1 // pred_fallthru
      _
    // Predicated region
    $region14: #{tpu_custom_call.1} parent=1 // pred_check
      _
    $region15: #{tpu_custom_call.1} parent=1 // pred_check_branch
      %17 = sbr.rel (0) target = $region17
    $region16: #{tpu_custom_call.1} parent=1 // pred_region
      _
    $region17: #{tpu_custom_call.1} parent=1 // pred_fallthru
      _
    %v18 = vld [vmem:[%s1] sm:$0xff]
    %v19 = vld [vmem:[%s1 + $0x8] sm:$0xff]
    %v20 = vld [vmem:[%s1 + $0x10] sm:$0xff]
    %v21 = vld [vmem:[%s1 + $0x18] sm:$0xff]
    %v22 = vld [vmem:[%s0] sm:$0xff]
    %v23 = vld [vmem:[%s0 + $0x8] sm:$0xff]
    %v24 = vld [vmem:[%s0 + $0x10] sm:$0xff]
    %v25 = vld [vmem:[%s0 + $0x18] sm:$0xff]
    %vm26 = vcmask 261120
    %v28 = vsel %vm26, %v18, 0
    %v31 = vsel %vm26, %v19, 0
    %v34 = vsel %vm26, %v20, 0
    %v37 = vsel %vm26, %v21, 0
    %39 = vmatprep.subr.mxu0 0.0
    %40 = vmatpush1.msra.mxu0 %v22
    %41 = vmatprep.subr.mxu0 0.0
    %42 = vmatpush1.msra.mxu0 %v23
    %43 = vmatprep.subr.mxu0 0.0
    %44 = vmatpush1.msra.mxu0 %v24
    %45 = vmatprep.subr.mxu0 0.0
    %46 = vmatpush1.msra.mxu0 %v25
    %47 = vmatprep.subr.mxu0 0.0
    %48 = vmatpush1.msra.mxu0 0.0
    %49 = vmatprep.subr.mxu0 0.0
    %50 = vmatpush1.msra.mxu0 0.0
    %51 = vmatprep.subr.mxu0 0.0
    %52 = vmatpush1.msra.mxu0 0.0
    %53 = vmatprep.subr.mxu0 0.0
    %54 = vmatpush1.msra.mxu0 0.0
    %55 = vmatprep.subr.mxu0 0.0
    %56 = vmatpush1.msra.mxu0 0.0
    %57 = vmatprep.subr.mxu0 0.0
    %58 = vmatpush1.msra.mxu0 0.0
    %59 = vmatprep.subr.mxu0 0.0
    %60 = vmatpush1.msra.mxu0 0.0
    %61 = vmatprep.subr.mxu0 0.0
    %62 = vmatpush1.msra.mxu0 0.0
    %63 = vmatprep.subr.mxu0 0.0
    %64 = vmatpush1.msra.mxu0 0.0
    %65 = vmatprep.subr.mxu0 0.0
    %66 = vmatpush1.msra.mxu0 0.0
    %67 = vmatprep.subr.mxu0 0.0
    %68 = vmatpush1.msra.mxu0 0.0
    %69 = vmatprep.subr.mxu0 0.0
    %70 = vmatpush1.msra.mxu0 0.0
    %71 = vmatprep.subr.mxu0 0.0
    %72 = vmatpush1.msra.mxu0 0.0
    %73 = vmatprep.subr.mxu0 0.0
    %74 = vmatpush1.msra.mxu0 0.0
    %75 = vmatprep.subr.mxu0 0.0
    %76 = vmatpush1.msra.mxu0 0.0
    %77 = vmatprep.subr.mxu0 0.0
    %78 = vmatpush1.msra.mxu0 0.0
    %79 = vmatprep.subr.mxu0 0.0
    %80 = vmatpush1.msra.mxu0 0.0
    %81 = vmatprep.subr.mxu0 0.0
    %82 = vmatpush1.msra.mxu0 0.0
    %83 = vmatprep.subr.mxu0 0.0
    %84 = vmatpush1.msra.mxu0 0.0
    %85 = vmatprep.subr.mxu0 0.0
    %86 = vmatpush1.msra.mxu0 0.0
    %87 = vmatprep.subr.mxu0 0.0
    %88 = vmatpush1.msra.mxu0 0.0
    %89 = vmatprep.subr.mxu0 0.0
    %90 = vmatpush1.msra.mxu0 0.0
    %91 = vmatprep.subr.mxu0 0.0
    %92 = vmatpush1.msra.mxu0 0.0
    %93 = vmatprep.subr.mxu0 0.0
    %94 = vmatpush1.msra.mxu0 0.0
    %95 = vmatprep.subr.mxu0 0.0
    %96 = vmatpush1.msra.mxu0 0.0
    %97 = vmatprep.subr.mxu0 0.0
    %98 = vmatpush1.msra.mxu0 0.0
    %99 = vmatprep.subr.mxu0 0.0
    %100 = vmatpush1.msra.mxu0 0.0
    %101 = vmatprep.subr.mxu0 0.0
    %102 = vmatpush1.msra.mxu0 0.0
    %103 = vmatprep.mubr.f32.mxu0 0.0
    %104 = vmatmul.mubr.f32.gmra.mrb[0].mxu0 %v28
    %v105 = vpop.f32.mrb[0].mxu0
    %v106 = vadd.f32 0.0, %v105
    %v107 = vpop.f32.mrb[0].mxu0
    %108 = vmatprep.mubr.f32.mxu0 0.0
    %109 = vmatmul.mubr.f32.gmra.mrb[0].mxu0 %v31
    %v110 = vpop.f32.mrb[0].mxu0
    %v111 = vadd.f32 0.0, %v110
    %v112 = vpop.f32.mrb[0].mxu0
    %113 = vmatprep.mubr.f32.mxu0 0.0
    %114 = vmatmul.mubr.f32.gmra.mrb[0].mxu0 %v34
    %v115 = vpop.f32.mrb[0].mxu0
    %v116 = vadd.f32 0.0, %v115
    %v117 = vpop.f32.mrb[0].mxu0
    %118 = vmatprep.mubr.f32.mxu0 0.0
    %119 = vmatmul.mubr.f32.gmra.mrb[0].mxu0 %v37
    %v120 = vpop.f32.mrb[0].mxu0
    %v121 = vadd.f32 0.0, %v120
    %v122 = vpop.f32.mrb[0].mxu0
    %123 = vdwg.mxu0
    %v124 = vld [vmem:[%s2] sm:$0xff]
    %v125 = vld [vmem:[%s2 + $0x8] sm:$0xff]
    %v126 = vld [vmem:[%s3] sm:$0x1]
    %v128 = vlaneseq
    %v129 = vshrl.u32 %v128, 7
    %v130 = vsub.s32 0, %v129
    %v131 = vrot.slane %v126, %v130
    %vm133 = vcmask 130048
    %v135 = vsel %vm133, %v106, 0
    %v138 = vsel %vm133, %v111, 0
    %v141 = vsel %vm133, %v116, 0
    %v144 = vsel %vm133, %v121, 0
    %146 = vmatprep.subr.mxu0 0.0
    %147 = vmatpush1.msra.mxu0 %v124
    %148 = vmatprep.subr.mxu0 0.0
    %149 = vmatpush1.msra.mxu0 %v125
    %150 = vmatprep.subr.mxu0 0.0
    %151 = vmatpush1.msra.mxu0 0.0
    %152 = vmatprep.subr.mxu0 0.0
    %153 = vmatpush1.msra.mxu0 0.0
    %154 = vmatprep.subr.mxu0 0.0
    %155 = vmatpush1.msra.mxu0 0.0
    %156 = vmatprep.subr.mxu0 0.0
    %157 = vmatpush1.msra.mxu0 0.0
    %158 = vmatprep.subr.mxu0 0.0
    %159 = vmatpush1.msra.mxu0 0.0
    %160 = vmatprep.subr.mxu0 0.0
    %161 = vmatpush1.msra.mxu0 0.0
    %162 = vmatprep.subr.mxu0 0.0
    %163 = vmatpush1.msra.mxu0 0.0
    %164 = vmatprep.subr.mxu0 0.0
    %165 = vmatpush1.msra.mxu0 0.0
    %166 = vmatprep.subr.mxu0 0.0
    %167 = vmatpush1.msra.mxu0 0.0
    %168 = vmatprep.subr.mxu0 0.0
    %169 = vmatpush1.msra.mxu0 0.0
    %170 = vmatprep.subr.mxu0 0.0
    %171 = vmatpush1.msra.mxu0 0.0
    %172 = vmatprep.subr.mxu0 0.0
    %173 = vmatpush1.msra.mxu0 0.0
    %174 = vmatprep.subr.mxu0 0.0
    %175 = vmatpush1.msra.mxu0 0.0
    %176 = vmatprep.subr.mxu0 0.0
    %177 = vmatpush1.msra.mxu0 0.0
    %178 = vmatprep.subr.mxu0 0.0
    %179 = vmatpush1.msra.mxu0 0.0
    %180 = vmatprep.subr.mxu0 0.0
    %181 = vmatpush1.msra.mxu0 0.0
    %182 = vmatprep.subr.mxu0 0.0
    %183 = vmatpush1.msra.mxu0 0.0
    %184 = vmatprep.subr.mxu0 0.0
    %185 = vmatpush1.msra.mxu0 0.0
    %186 = vmatprep.subr.mxu0 0.0
    %187 = vmatpush1.msra.mxu0 0.0
    %188 = vmatprep.subr.mxu0 0.0
    %189 = vmatpush1.msra.mxu0 0.0
    %190 = vmatprep.subr.mxu0 0.0
    %191 = vmatpush1.msra.mxu0 0.0
    %192 = vmatprep.subr.mxu0 0.0
    %193 = vmatpush1.msra.mxu0 0.0
    %194 = vmatprep.subr.mxu0 0.0
    %195 = vmatpush1.msra.mxu0 0.0
    %196 = vmatprep.subr.mxu0 0.0
    %197 = vmatpush1.msra.mxu0 0.0
    %198 = vmatprep.subr.mxu0 0.0
    %199 = vmatpush1.msra.mxu0 0.0
    %200 = vmatprep.subr.mxu0 0.0
    %201 = vmatpush1.msra.mxu0 0.0
    %202 = vmatprep.subr.mxu0 0.0
    %203 = vmatpush1.msra.mxu0 0.0
    %204 = vmatprep.subr.mxu0 0.0
    %205 = vmatpush1.msra.mxu0 0.0
    %206 = vmatprep.subr.mxu0 0.0
    %207 = vmatpush1.msra.mxu0 0.0
    %208 = vmatprep.subr.mxu0 0.0
    %209 = vmatpush1.msra.mxu0 0.0
    %210 = vmatprep.mubr.f32.mxu0 0.0
    %211 = vmatmul.mubr.f32.gmra.mrb[0].mxu0 %v135
    %v212 = vpop.f32.mrb[0].mxu0
    %v213 = vadd.f32 %v131, %v212
    %v214 = vpop.f32.mrb[0].mxu0
    %215 = vmatprep.mubr.f32.mxu0 0.0
    %216 = vmatmul.mubr.f32.gmra.mrb[0].mxu0 %v138
    %v217 = vpop.f32.mrb[0].mxu0
    %v218 = vadd.f32 %v131, %v217
    %v219 = vpop.f32.mrb[0].mxu0
    %220 = vmatprep.mubr.f32.mxu0 0.0
    %221 = vmatmul.mubr.f32.gmra.mrb[0].mxu0 %v141
    %v222 = vpop.f32.mrb[0].mxu0
    %v223 = vadd.f32 %v131, %v222
    %v224 = vpop.f32.mrb[0].mxu0
    %225 = vmatprep.mubr.f32.mxu0 0.0
    %226 = vmatmul.mubr.f32.gmra.mrb[0].mxu0 %v144
    %v227 = vpop.f32.mrb[0].mxu0
    %v228 = vadd.f32 %v131, %v227
    %v229 = vpop.f32.mrb[0].mxu0
    %230 = vdwg.mxu0
    %v231 = vmax.f32 %v213, 0.0
    %v232 = vmax.f32 %v218, 0.0
    %v233 = vmax.f32 %v223, 0.0
    %v234 = vmax.f32 %v228, 0.0
    %235 = vst.msk [vmem:[#allocation2] sm:$0xff] %vm26, %v231
    %236 = vst.msk [vmem:[#allocation2 + $0x8] sm:$0xff] %vm26, %v232
    %237 = vst.msk [vmem:[#allocation2 + $0x10] sm:$0xff] %vm26, %v233
    %238 = vst.msk [vmem:[#allocation2 + $0x18] sm:$0xff] %vm26, %v234
    // Predicated region
    $region18: #{tpu_custom_call.1} parent=1 // pred_check
      _
    $region19: #{tpu_custom_call.1} parent=1 // pred_check_branch
      %240 = sbr.rel (0) target = $region21
    $region20: #{tpu_custom_call.1} parent=1 // pred_region
      %s242 = ssub.s32 512, 512
      %243 = vsyncadd [#allocation3], %s242
      %s244 = sshll.u32 [#allocation2], 4
      %s245 = int_to_ptr.vmem [resolvable:$true] %s244
      %250 = dma.vmem_to_hbm [thread:$0]  %s245, 512, %s4, [#allocation3], 128, 128, 8
    $region21: #{tpu_custom_call.1} parent=1 // pred_fallthru
      _
    // Predicated region
    $region22: #{tpu_custom_call.1} parent=1 // pred_check
      _
    $region23: #{tpu_custom_call.1} parent=1 // pred_check_branch
      %252 = sbr.rel (0) target = $region25
    $region24: #{tpu_custom_call.1} parent=1 // pred_region
      %253 = dma.done [#allocation3], 512
    $region25: #{tpu_custom_call.1} parent=1 // pred_fallthru
      _
    %254 = vsyncpa [#allocation3], 1

</llo_original>
